<compile_context>
chip_gen: v7x
topology: tpu7x:2x2x1
jax: 0.10.0
libtpu: 0.0.40
codegen_flags: <defaults>
</compile_context>

<pallas_src>
import functools

import jax
import jax.numpy as jnp
from jax import lax
from jax.experimental import pallas as pl
from jax.experimental.pallas import tpu as pltpu

EPS = 1e-5            # layer-norm eps (config.norm_eps)
NEG_INF = -1e30       # finite "minus infinity" for the causal mask (no NaNs)
TILE_T = 128          # sequence tile (falls back to full T if not divisible)
TILE_V = 1024         # vocab tile for the lm_head kernel
VMEM_LIMIT = 60 * 1024 * 1024   # headroom below v7x's 64 MiB physical VMEM


# ---------------------------------------------------------------------------
# in-kernel helpers (pure jnp, fp32)
# ---------------------------------------------------------------------------
def _layernorm(x, w, b):
    mu = jnp.mean(x, axis=-1, keepdims=True)
    var = jnp.mean(jnp.square(x - mu), axis=-1, keepdims=True)
    return (x - mu) * lax.rsqrt(var + EPS) * w + b


def _gelu_tanh(x):
    c = jnp.sqrt(2.0 / jnp.pi).astype(x.dtype)
    return 0.5 * x * (1.0 + jnp.tanh(c * (x + 0.044715 * x * x * x)))


def _cparams(sem):
    return pltpu.CompilerParams(dimension_semantics=sem,
                                vmem_limit_bytes=VMEM_LIMIT)


def _const_spec(shape, grid_rank):
    """Full-array block whose index is constant across the grid (weights)."""
    zero = (0,) * len(shape)
    if grid_rank == 2:
        return pl.BlockSpec(shape, lambda i, j: zero)
    if grid_rank == 3:
        return pl.BlockSpec(shape, lambda i, j, k: zero)
    raise ValueError(grid_rank)


def _tile(dim, desired):
    return desired if dim % desired == 0 else dim


# ---------------------------------------------------------------------------
# kernel 1: ln1 + qkv projection   (grid = (B, T_tiles))
# ---------------------------------------------------------------------------
def qkv_kernel(x_ref, ln1w_ref, ln1b_ref, wqkv_ref, bqkv_ref, o_ref):
    x = x_ref[0].astype(jnp.float32)                       # (Tq, C) fp32
    h = _layernorm(x, ln1w_ref[...], ln1b_ref[...]).astype(jnp.bfloat16)
    qkv = jnp.dot(h, wqkv_ref[...],                        # (C, 3C) bf16, no .T
                  preferred_element_type=jnp.float32) + bqkv_ref[...]
    o_ref[0] = qkv.astype(o_ref.dtype)


# ---------------------------------------------------------------------------
# kernel 2: blocked causal flash attention   (grid = (B, Q_tiles, KV_tiles))
#   q/k/v are three views of the same [B, T, 3C] array (block index 0/1/2 on
#   the last axis).  Per-head 2-D matmuls keep T on the lane axis; running
#   max / sum / accumulator live in VMEM scratch; fully-masked KV tiles are
#   skipped with pl.when.
# ---------------------------------------------------------------------------
def flash_attn_kernel(n_heads, q_ref, k_ref, v_ref, o_ref, m_sc, l_sc, acc_sc):
    qi = pl.program_id(1)
    ki = pl.program_id(2)
    Tq = q_ref.shape[1]
    Tk = k_ref.shape[1]
    C = q_ref.shape[2]
    hd = C // n_heads

    @pl.when(ki == 0)
    def _init():
        m_sc[...] = jnp.full_like(m_sc, NEG_INF)
        l_sc[...] = jnp.zeros_like(l_sc)
        acc_sc[...] = jnp.zeros_like(acc_sc)

    @pl.when(ki <= qi)          # causal tile skipping (upper-triangular tiles)
    def _compute():
        # single (Tq, Tk) causal mask bias, shared by all heads
        row = lax.broadcasted_iota(jnp.int32, (Tq, Tk), 0) + qi * Tq
        col = lax.broadcasted_iota(jnp.int32, (Tq, Tk), 1) + ki * Tk
        mask_bias = jnp.where(row >= col, 0.0, NEG_INF).astype(jnp.float32)

        q = q_ref[0]            # (Tq, C) bf16, 1/sqrt(hd) already folded in
        k = k_ref[0]            # (Tk, C) bf16
        v = v_ref[0]            # (Tk, C) bf16
        for h in range(n_heads):                       # static per-head loop
            sl = slice(h * hd, (h + 1) * hd)
            # s = q_h @ k_h^T without materializing a transpose
            s = lax.dot_general(q[:, sl], k[:, sl],
                                (((1,), (1,)), ((), ())),
                                preferred_element_type=jnp.float32)
            s = s + mask_bias                          # (Tq, Tk) fp32

            m_prev = m_sc[:, h:h + 1]                  # (Tq, 1)
            m_new = jnp.maximum(m_prev, jnp.max(s, axis=-1, keepdims=True))
            alpha = jnp.exp(m_prev - m_new)
            p = jnp.exp(s - m_new)
            l_sc[:, h:h + 1] = alpha * l_sc[:, h:h + 1] + \
                jnp.sum(p, axis=-1, keepdims=True)
            acc_sc[:, sl] = alpha * acc_sc[:, sl] + jnp.dot(
                p.astype(jnp.bfloat16), v[:, sl],
                preferred_element_type=jnp.float32)
            m_sc[:, h:h + 1] = m_new

    @pl.when(ki == pl.num_programs(2) - 1)
    def _finalize():
        parts = []
        for h in range(n_heads):
            sl = slice(h * hd, (h + 1) * hd)
            inv = pl.reciprocal(l_sc[:, h:h + 1], approx=True)   # EUP
            parts.append(acc_sc[:, sl] * inv)
        o_ref[0] = jnp.concatenate(parts, axis=1).astype(o_ref.dtype)


# ---------------------------------------------------------------------------
# kernel 3: attn out-proj + residual + ln2 + MLP + residual  (grid = (B, T_tiles))
# ---------------------------------------------------------------------------
def proj_mlp_kernel(x_ref, y_ref, wpo_ref, bpo_ref, ln2w_ref, ln2b_ref,
                    wfc_ref, bfc_ref, wp2_ref, bp2_ref, o_ref):
    x = x_ref[0].astype(jnp.float32)                       # residual stream
    y = y_ref[0].astype(jnp.bfloat16)                      # attention output
    x = x + jnp.dot(y, wpo_ref[...],
                    preferred_element_type=jnp.float32) + bpo_ref[...]

    h = _layernorm(x, ln2w_ref[...], ln2b_ref[...]).astype(jnp.bfloat16)
    f = jnp.dot(h, wfc_ref[...],
                preferred_element_type=jnp.float32) + bfc_ref[...]
    f = _gelu_tanh(f).astype(jnp.bfloat16)                 # GELU in fp32
    f = jnp.dot(f, wp2_ref[...],
                preferred_element_type=jnp.float32) + bp2_ref[...]
    o_ref[0] = (x + f).astype(o_ref.dtype)


# ---------------------------------------------------------------------------
# kernel 4: ln_f + lm_head, vocab-tiled   (grid = (B, T_tiles, V_tiles))
# ---------------------------------------------------------------------------
def head_kernel(x_ref, lnw_ref, lnb_ref, wlm_ref, o_ref):
    x = x_ref[0].astype(jnp.float32)
    h = _layernorm(x, lnw_ref[...], lnb_ref[...]).astype(jnp.bfloat16)
    o_ref[0] = jnp.dot(h, wlm_ref[...],
                       preferred_element_type=jnp.float32).astype(o_ref.dtype)


# ---------------------------------------------------------------------------
# wrappers
# ---------------------------------------------------------------------------
def run_qkv(x, layer):
    B, T, C = x.shape
    tt = _tile(T, TILE_T)
    return pl.pallas_call(
        qkv_kernel,
        out_shape=jax.ShapeDtypeStruct((B, T, 3 * C), jnp.bfloat16),
        grid=(B, T // tt),
        in_specs=[pl.BlockSpec((1, tt, C), lambda b, t: (b, t, 0)),
                  _const_spec(layer['ln1w'].shape, 2),
                  _const_spec(layer['ln1b'].shape, 2),
                  _const_spec(layer['wqkv'].shape, 2),
                  _const_spec(layer['bqkv'].shape, 2)],
        out_specs=pl.BlockSpec((1, tt, 3 * C), lambda b, t: (b, t, 0)),
        compiler_params=_cparams(("parallel", "parallel")),
    )(x, layer['ln1w'], layer['ln1b'], layer['wqkv'], layer['bqkv'])


def run_flash_attn(qkv, n_heads):
    B, T, C3 = qkv.shape
    C = C3 // 3
    tt = _tile(T, TILE_T)
    nt = T // tt
    return pl.pallas_call(
        functools.partial(flash_attn_kernel, n_heads),
        out_shape=jax.ShapeDtypeStruct((B, T, C), jnp.bfloat16),
        grid=(B, nt, nt),
        in_specs=[pl.BlockSpec((1, tt, C), lambda b, q, k: (b, q, 0)),   # q
                  pl.BlockSpec((1, tt, C), lambda b, q, k: (b, k, 1)),   # k
                  pl.BlockSpec((1, tt, C), lambda b, q, k: (b, k, 2))],  # v
        out_specs=pl.BlockSpec((1, tt, C), lambda b, q, k: (b, q, 0)),
        scratch_shapes=[pltpu.VMEM((tt, n_heads), jnp.float32),   # running max
                        pltpu.VMEM((tt, n_heads), jnp.float32),   # running sum
                        pltpu.VMEM((tt, C), jnp.float32)],        # accumulator
        compiler_params=_cparams(("parallel", "parallel", "arbitrary")),
    )(qkv, qkv, qkv)


def run_proj_mlp(x, y, layer):
    B, T, C = x.shape
    tt = _tile(T, TILE_T)
    args = (x, y, layer['wpo'], layer['bpo'], layer['ln2w'], layer['ln2b'],
            layer['wfc'], layer['bfc'], layer['wp2'], layer['bp2'])
    in_specs = [pl.BlockSpec((1, tt, C), lambda b, t: (b, t, 0)),
                pl.BlockSpec((1, tt, C), lambda b, t: (b, t, 0))] + \
               [_const_spec(a.shape, 2) for a in args[2:]]
    return pl.pallas_call(
        proj_mlp_kernel,
        out_shape=jax.ShapeDtypeStruct((B, T, C), x.dtype),
        grid=(B, T // tt),
        in_specs=in_specs,
        out_specs=pl.BlockSpec((1, tt, C), lambda b, t: (b, t, 0)),
        compiler_params=_cparams(("parallel", "parallel")),
    )(*args)


def run_head(x, lnw, lnb, wlm_t):
    B, T, C = x.shape
    V = wlm_t.shape[1]
    tt = _tile(T, TILE_T)
    tv = _tile(V, TILE_V)
    # TODO(synk): for production vocab sizes (e.g. 50257) pad V to a multiple
    # of TILE_V so the vocab dimension actually tiles instead of falling back.
    return pl.pallas_call(
        head_kernel,
        out_shape=jax.ShapeDtypeStruct((B, T, V), jnp.float32),
        grid=(B, T // tt, V // tv),
        in_specs=[pl.BlockSpec((1, tt, C), lambda b, t, v: (b, t, 0)),
                  _const_spec(lnw.shape, 3),
                  _const_spec(lnb.shape, 3),
                  pl.BlockSpec((C, tv), lambda b, t, v: (0, v))],
        out_specs=pl.BlockSpec((1, tt, tv), lambda b, t, v: (b, t, v)),
        compiler_params=_cparams(("parallel", "parallel", "parallel")),
    )(x, lnw, lnb, wlm_t)


def gpt_forward(idx, params):
    """idx: int32 [B, T] token ids -> fp32 logits [B, T, V]."""
    B, T = idx.shape
    # token-embedding gather + positional add kept in plain JAX (glue)
    x = params['wte'][idx] + params['wpe'][:T][None, :, :]        # [B, T, C] fp32
    n_heads = params['n_heads']
    for layer in params['blocks']:
        qkv = run_qkv(x, layer)                    # ln1 + c_attn
        y = run_flash_attn(qkv, n_heads)           # blocked causal attention
        x = run_proj_mlp(x, y, layer)              # c_proj + res + ln2 + MLP + res
    return run_head(x, params['ln_f_w'], params['ln_f_b'], params['lm_head'])


# ---------------------------------------------------------------------------
# deterministic parameter construction (mirrors GPT._init_weights), already in
# kernel-ready layout: weights transposed to (in, out), bf16, q-scale folded.
# ---------------------------------------------------------------------------
def make_params(key, *, vocab, d_model, n_heads, n_layers, d_inner, maxlen):
    C, I = d_model, d_inner
    hd = C // n_heads

    def normal(k, shape):
        return 0.02 * jax.random.normal(k, shape, jnp.float32)

    keys = iter(jax.random.split(key, 4 * n_layers + 3))
    blocks = []
    for _ in range(n_layers):
        # nn.Linear stores (out, in); generate in that layout then transpose.
        wqkv = normal(next(keys), (3 * C, C)).T                 # (C, 3C)
        # fold the 1/sqrt(hd) attention scale into the q columns (one-time);
        # the qkv bias is zero-initialized so no bias scaling is needed.
        scale = jnp.concatenate([jnp.full((C,), 1.0 / jnp.sqrt(hd)),
                                 jnp.ones((2 * C,))]).astype(jnp.float32)
        wqkv = wqkv * scale[None, :]
        blocks.append(dict(
            ln1w=jnp.ones((1, C), jnp.float32),
            ln1b=jnp.zeros((1, C), jnp.float32),
            wqkv=wqkv.astype(jnp.bfloat16),                      # (C, 3C)
            bqkv=jnp.zeros((1, 3 * C), jnp.float32),
            wpo=normal(next(keys), (C, C)).T.astype(jnp.bfloat16),   # (C, C)
            bpo=jnp.zeros((1, C), jnp.float32),
            ln2w=jnp.ones((1, C), jnp.float32),
            ln2b=jnp.zeros((1, C), jnp.float32),
            wfc=normal(next(keys), (I, C)).T.astype(jnp.bfloat16),   # (C, I)
            bfc=jnp.zeros((1, I), jnp.float32),
            wp2=normal(next(keys), (C, I)).T.astype(jnp.bfloat16),   # (I, C)
            bp2=jnp.zeros((1, C), jnp.float32),
        ))
    return dict(
        wte=normal(next(keys), (vocab, C)),                      # fp32 for gather
        wpe=normal(next(keys), (maxlen, C)),
        blocks=blocks,
        ln_f_w=jnp.ones((1, C), jnp.float32),
        ln_f_b=jnp.zeros((1, C), jnp.float32),
        lm_head=normal(next(keys), (vocab, C)).T.astype(jnp.bfloat16),  # (C, V)
        n_heads=n_heads,
    )


if __name__ == "__main__":
    # small synthetic config
    VOCAB, D_MODEL, N_HEADS, N_LAYERS, D_INNER, MAXLEN = 64, 32, 4, 2, 128, 16
    B, T = 2, 8

    key = jax.random.PRNGKey(0)
    kp, ki = jax.random.split(key)
    params = make_params(kp, vocab=VOCAB, d_model=D_MODEL, n_heads=N_HEADS,
                         n_layers=N_LAYERS, d_inner=D_INNER, maxlen=MAXLEN)
    idx = jax.random.randint(ki, (B, T), 0, VOCAB, dtype=jnp.int32)

    logits = gpt_forward(idx, params)
    jax.block_until_ready(logits)
    assert logits.shape == (B, T, VOCAB), logits.shape
    assert bool(jnp.all(jnp.isfinite(logits)))
    print("KERNEL_OK")
</pallas_src>

<mosaic_0001>
module attributes {stable_mosaic.version = 11 : i64} {
  func.func @qkv_kernel(%arg0: i32, %arg1: i32, %arg2: memref<1x8x32xf32, #tpu.memory_space<vmem>>, %arg3: memref<1x32xf32, #tpu.memory_space<vmem>>, %arg4: memref<1x32xf32, #tpu.memory_space<vmem>>, %arg5: memref<32x96xbf16, #tpu.memory_space<vmem>>, %arg6: memref<1x96xf32, #tpu.memory_space<vmem>>, %arg7: memref<1x8x96xbf16, #tpu.memory_space<vmem>>) attributes {dimension_semantics = [#tpu.dimension_semantics<parallel>, #tpu.dimension_semantics<parallel>], iteration_bounds = array<i64: 2, 1>, scalar_prefetch = 0 : i64, scratch_operands = 0 : i64, tpu.core_type = #tpu.core_type<tc>, window_params = [{transform_indices = @transform_0, window_bounds = array<i64: 1, 8, 32>}, {pipeline_mode = #tpu.pipeline_mode<synchronous>, transform_indices = @transform_1, window_bounds = array<i64: 1, 32>}, {pipeline_mode = #tpu.pipeline_mode<synchronous>, transform_indices = @transform_2, window_bounds = array<i64: 1, 32>}, {pipeline_mode = #tpu.pipeline_mode<synchronous>, transform_indices = @transform_3, window_bounds = array<i64: 32, 96>}, {pipeline_mode = #tpu.pipeline_mode<synchronous>, transform_indices = @transform_4, window_bounds = array<i64: 1, 96>}, {transform_indices = @transform_5, window_bounds = array<i64: 1, 8, 96>}]} {
    %c0 = arith.constant 0 : index
    %c0_0 = arith.constant 0 : index
    %c0_1 = arith.constant 0 : index
    %0 = vector.load %arg2[%c0, %c0_0, %c0_1] : memref<1x8x32xf32, #tpu.memory_space<vmem>>, vector<1x8x32xf32>
    %1 = vector.shape_cast %0 : vector<1x8x32xf32> to vector<8x32xf32>
    %c0_2 = arith.constant 0 : index
    %c0_3 = arith.constant 0 : index
    %2 = vector.load %arg3[%c0_2, %c0_3] : memref<1x32xf32, #tpu.memory_space<vmem>>, vector<1x32xf32>
    %c0_4 = arith.constant 0 : index
    %c0_5 = arith.constant 0 : index
    %3 = vector.load %arg4[%c0_4, %c0_5] : memref<1x32xf32, #tpu.memory_space<vmem>>, vector<1x32xf32>
    %cst = arith.constant dense<0.000000e+00> : vector<8xf32>
    %4 = vector.multi_reduction <add>, %1, %cst [1] : vector<8x32xf32> to vector<8xf32>
    %5 = vector.shape_cast %4 : vector<8xf32> to vector<8x1xf32>
    %cst_6 = arith.constant 3.200000e+01 : f32
    %6 = vector.broadcast %cst_6 : f32 to vector<8x1xf32>
    %7 = arith.divf %5, %6 : vector<8x1xf32>
    %8 = vector.broadcast %7 : vector<8x1xf32> to vector<8x32xf32>
    %9 = arith.subf %1, %8 : vector<8x32xf32>
    %10 = arith.mulf %9, %9 : vector<8x32xf32>
    %cst_7 = arith.constant dense<0.000000e+00> : vector<8xf32>
    %11 = vector.multi_reduction <add>, %10, %cst_7 [1] : vector<8x32xf32> to vector<8xf32>
    %12 = vector.shape_cast %11 : vector<8xf32> to vector<8x1xf32>
    %cst_8 = arith.constant 3.200000e+01 : f32
    %13 = vector.broadcast %cst_8 : f32 to vector<8x1xf32>
    %14 = arith.divf %12, %13 : vector<8x1xf32>
    %15 = vector.broadcast %7 : vector<8x1xf32> to vector<8x32xf32>
    %16 = arith.subf %1, %15 : vector<8x32xf32>
    %cst_9 = arith.constant 9.99999974E-6 : f32
    %17 = vector.broadcast %cst_9 : f32 to vector<8x1xf32>
    %18 = arith.addf %14, %17 : vector<8x1xf32>
    %19 = math.rsqrt %18 : vector<8x1xf32>
    %20 = vector.broadcast %19 : vector<8x1xf32> to vector<8x32xf32>
    %21 = arith.mulf %16, %20 : vector<8x32xf32>
    %22 = vector.broadcast %2 : vector<1x32xf32> to vector<8x32xf32>
    %23 = arith.mulf %21, %22 : vector<8x32xf32>
    %24 = vector.broadcast %3 : vector<1x32xf32> to vector<8x32xf32>
    %25 = arith.addf %23, %24 : vector<8x32xf32>
    %26 = arith.truncf %25 : vector<8x32xf32> to vector<8x32xbf16>
    %c0_10 = arith.constant 0 : index
    %c0_11 = arith.constant 0 : index
    %27 = vector.load %arg5[%c0_10, %c0_11] : memref<32x96xbf16, #tpu.memory_space<vmem>>, vector<32x96xbf16>
    %cst_12 = arith.constant dense<0.000000e+00> : vector<8x96xf32>
    %28 = tpu.matmul %26, %27, %cst_12 {dimension_numbers = #tpu.dot_dimension_numbers<[1], [0], [0], [1], [0, 0, 1, 1], [], []>} : vector<8x32xbf16>, vector<32x96xbf16>, vector<8x96xf32> -> vector<8x96xf32>
    %c0_13 = arith.constant 0 : index
    %c0_14 = arith.constant 0 : index
    %29 = vector.load %arg6[%c0_13, %c0_14] : memref<1x96xf32, #tpu.memory_space<vmem>>, vector<1x96xf32>
    %30 = vector.broadcast %29 : vector<1x96xf32> to vector<8x96xf32>
    %31 = arith.addf %28, %30 : vector<8x96xf32>
    %32 = arith.truncf %31 : vector<8x96xf32> to vector<8x96xbf16>
    %c0_15 = arith.constant 0 : index
    %c0_16 = arith.constant 0 : index
    %c0_17 = arith.constant 0 : index
    %33 = vector.load %arg7[%c0_15, %c0_16, %c0_17] : memref<1x8x96xbf16, #tpu.memory_space<vmem>>, vector<1x8x96xbf16>
    %34 = vector.shape_cast %33 : vector<1x8x96xbf16> to vector<8x96xbf16>
    %35 = vector.shape_cast %32 : vector<8x96xbf16> to vector<1x8x96xbf16>
    tpu.vector_store %arg7[%c0_15, %c0_16, %c0_17], %35 {strides = array<i32>} : memref<1x8x96xbf16, #tpu.memory_space<vmem>>, vector<1x8x96xbf16>,
    return
  }
  func.func @transform_0(%arg0: i32, %arg1: i32) -> (i32, i32, i32) {
    %c0_i32 = arith.constant 0 : i32
    %c0_i32_0 = arith.constant 0 : i32
    return %arg0, %arg1, %c0_i32 : i32, i32, i32
  }
  func.func @transform_1(%arg0: i32, %arg1: i32) -> (i32, i32) {
    %c0_i32 = arith.constant 0 : i32
    %c0_i32_0 = arith.constant 0 : i32
    %c0_i32_1 = arith.constant 0 : i32
    return %c0_i32, %c0_i32_0 : i32, i32
  }
  func.func @transform_2(%arg0: i32, %arg1: i32) -> (i32, i32) {
    %c0_i32 = arith.constant 0 : i32
    %c0_i32_0 = arith.constant 0 : i32
    %c0_i32_1 = arith.constant 0 : i32
    return %c0_i32, %c0_i32_0 : i32, i32
  }
  func.func @transform_3(%arg0: i32, %arg1: i32) -> (i32, i32) {
    %c0_i32 = arith.constant 0 : i32
    %c0_i32_0 = arith.constant 0 : i32
    %c0_i32_1 = arith.constant 0 : i32
    return %c0_i32, %c0_i32_0 : i32, i32
  }
  func.func @transform_4(%arg0: i32, %arg1: i32) -> (i32, i32) {
    %c0_i32 = arith.constant 0 : i32
    %c0_i32_0 = arith.constant 0 : i32
    %c0_i32_1 = arith.constant 0 : i32
    return %c0_i32, %c0_i32_0 : i32, i32
  }
  func.func @transform_5(%arg0: i32, %arg1: i32) -> (i32, i32, i32) {
    %c0_i32 = arith.constant 0 : i32
    %c0_i32_0 = arith.constant 0 : i32
    return %arg0, %arg1, %c0_i32 : i32, i32, i32
  }
}

</mosaic_0001>

<llo_original>
// kernel: tpu_custom_call.1
$region0: #{tpu_custom_call.1}
  #allocation0 [shape = 'u32[]', space=smem, size = 0x4, offset = 0x4, fixed_abs, tag = 'smem constant byte address 0x4 - core index']
  #allocation1 [shape = 'u32[144,128]{1,0:T(1,128)}', space=vmem, size = 0x12000, scoped, tag = 'internal scratch']
  %s0 = inlined_call_operand.hbm [shape: f32[2,8,32], index: 0, kind: input, shape index: {}]
  %s1 = inlined_call_operand.vmem [shape: f32[1,32], index: 1, kind: input, shape index: {}]
  %s2 = inlined_call_operand.vmem [shape: f32[1,32], index: 2, kind: input, shape index: {}]
  %s3 = inlined_call_operand.hbm [shape: bf16[32,96], index: 3, kind: input, shape index: {}]
  %s4 = inlined_call_operand.vmem [shape: f32[1,96], index: 4, kind: input, shape index: {}]
  %s5 = inlined_call_operand.hbm [shape: bf16[2,8,96], index: 5, kind: output, shape index: {}]
  %s6 = sld [smem:[#allocation0]]
  $region61: #{tpu_custom_call.1} parent=0
    _
  %s8 = ssub.s32 1, %s6
  %s9 = scalar_select 0, %s8, %s6
  $region1: #{tpu_custom_call.1} parent=0
    #allocation2 [shape = 'u8[8192]{0}', space=vmem, size = 0x2000, scoped, tag = 'input window, operand 0']
    #allocation3 [shape = 's32[2]{0}', space=sflag, size = 0x8, scoped, tag = 'scoped memory for tpu_custom_call.1']
    #allocation4 [shape = 's32[2]{0}', space=sflag, size = 0x8, scoped, tag = 'scoped memory for tpu_custom_call.1']
    #allocation5 [shape = 'u8[8192]{0}', space=vmem, size = 0x2000, scoped, tag = 'input window, operand 3, single buffered']
    #allocation6 [shape = 's32[1]{0}', space=sflag, size = 0x4, scoped, tag = 'scoped memory for tpu_custom_call.1']
    #allocation7 [shape = 'u8[4096]{0}', space=vmem, size = 0x1000, scoped, tag = 'output window, operand 0']
    %10 = vsyncpa [#allocation3], 0
    %s11 = scalar_lea.sflag [#allocation3], 1
    %12 = vsyncpa %s11, 0
    %13 = vsyncpa [#allocation6], 0
    %14 = vsyncpa [#allocation4], 0
    %s15 = scalar_lea.sflag [#allocation4], 1
    %16 = vsyncpa %s15, 0
    loop: start=0, step=1, limit=4
    $region2: #{tpu_custom_call.1} parent=1 // loop_pre_header
      _
    $region3: #{tpu_custom_call.1} parent=1 // loop_header
      %s18 = sphi 0, %s22
      %p19 = scmp.ge.s32.totalorder %s18, 4
      %s25 = sphi 0, %s37
      %s26 = sphi 0, %s33
      %s27 = sphi 0, %s25
      %s28 = sphi 0, %s26
      %s29 = sphi 0, %s27
      %s30 = sphi 0, %s28
      %s42 = sphi 0, %s44
      %s45 = sphi 0, %s42
      %s46 = sphi 0, %s45
      %s62 = sphi 0, %s46
      %s66 = sphi 0, %s66
      %s68 = sphi 0, %s66
      %s69 = sphi 0, %s68
      %s83 = sphi 0, %s69
      %s87 = sphi 0, %s87
      %s89 = sphi 0, %s87
      %s90 = sphi 0, %s89
      %s104 = sphi 0, %s90
      %s108 = sphi 0, %s108
      %s110 = sphi 0, %s108
      %s111 = sphi 0, %s110
      %s125 = sphi 0, %s111
      %s129 = sphi 0, %s129
      %s131 = sphi 0, %s129
      %s132 = sphi 0, %s131
      %s146 = sphi 0, %s132
      %s154 = sphi 0, %s156
      %s157 = sphi 0, %s154
      %s158 = sphi 0, %s157
      %s174 = sphi 0, %s158
    $region4: #{tpu_custom_call.1} parent=1 // loop_header_branch
      %21 = sbr.rel (%p19) target = $region8
    $region5: #{tpu_custom_call.1} parent=1 // loop_body
      %s23 = ssub.s32 %s18, 1
      %s24 = ssub.s32 %s18, 2
      %s31 = sadd.s32 1, %s26
      %p32 = scmp.ge.s32.totalorder %s31, 1
      %s33 = scalar_select %p32, 0, %s31
      %s34 = sadd.s32 1, %s25
      %s35 = scalar_select %p32, %s34, %s25
      %p36 = scmp.ge.s32.totalorder %s35, 2
      %s37 = scalar_select %p36, 0, %s35
      %s38 = ssub.s32 %s25, %s37
      %s39 = ssub.s32 %s26, %s33
      %s40 = sor.u32 %s38, %s39
      %p41 = scmp.eq.s32.totalorder %s40, 0
      %s43 = sadd.s32 %s42, 1
      %s44 = scalar_select %p41, %s42, %s43
      %p47 = pneg %p41
      %p48 = scmp.eq.s32.totalorder %s18, 1
      %p49 = por %p47, %p48
      %p50 = scmp.ne.s32.totalorder %s42, %s45
      %p51 = scmp.eq.s32.totalorder %s18, 0
      %p52 = por %p50, %p51
      %p53 = scmp.ne.s32.totalorder %s42, %s45
      %p54 = scmp.eq.s32.totalorder %s23, 1
      %p55 = por %p53, %p54
      %p56 = scmp.ne.s32.totalorder %s45, %s46
      %p57 = scmp.eq.s32.totalorder %s23, 0
      %p58 = por %p56, %p57
      %p59 = scmp.ne.s32.totalorder %s45, %s46
      %p60 = scmp.eq.s32.totalorder %s24, 1
      %p61 = por %p59, %p60
      %p63 = scmp.ne.s32.totalorder %s46, %s62
      %p64 = scmp.eq.s32.totalorder %s24, 0
      %p65 = por %p63, %p64
      %s67 = sadd.s32 %s66, 1
      %p70 = scmp.eq.s32.totalorder %s18, 1
      %p71 = scmp.ne.s32.totalorder %s66, %s68
      %p72 = scmp.eq.s32.totalorder %s18, 0
      %p73 = por %p71, %p72
      %p74 = scmp.ne.s32.totalorder %s66, %s68
      %p75 = scmp.eq.s32.totalorder %s23, 1
      %p76 = por %p74, %p75
      %p77 = scmp.ne.s32.totalorder %s68, %s69
      %p78 = scmp.eq.s32.totalorder %s23, 0
      %p79 = por %p77, %p78
      %p80 = scmp.ne.s32.totalorder %s68, %s69
      %p81 = scmp.eq.s32.totalorder %s24, 1
      %p82 = por %p80, %p81
      %p84 = scmp.ne.s32.totalorder %s69, %s83
      %p85 = scmp.eq.s32.totalorder %s24, 0
      %p86 = por %p84, %p85
      %s88 = sadd.s32 %s87, 1
      %p91 = scmp.eq.s32.totalorder %s18, 1
      %p92 = scmp.ne.s32.totalorder %s87, %s89
      %p93 = scmp.eq.s32.totalorder %s18, 0
      %p94 = por %p92, %p93
      %p95 = scmp.ne.s32.totalorder %s87, %s89
      %p96 = scmp.eq.s32.totalorder %s23, 1
      %p97 = por %p95, %p96
      %p98 = scmp.ne.s32.totalorder %s89, %s90
      %p99 = scmp.eq.s32.totalorder %s23, 0
      %p100 = por %p98, %p99
      %p101 = scmp.ne.s32.totalorder %s89, %s90
      %p102 = scmp.eq.s32.totalorder %s24, 1
      %p103 = por %p101, %p102
      %p105 = scmp.ne.s32.totalorder %s90, %s104
      %p106 = scmp.eq.s32.totalorder %s24, 0
      %p107 = por %p105, %p106
      %s109 = sadd.s32 %s108, 1
      %p112 = scmp.eq.s32.totalorder %s18, 1
      %p113 = scmp.ne.s32.totalorder %s108, %s110
      %p114 = scmp.eq.s32.totalorder %s18, 0
      %p115 = por %p113, %p114
      %p116 = scmp.ne.s32.totalorder %s108, %s110
      %p117 = scmp.eq.s32.totalorder %s23, 1
      %p118 = por %p116, %p117
      %p119 = scmp.ne.s32.totalorder %s110, %s111
      %p120 = scmp.eq.s32.totalorder %s23, 0
      %p121 = por %p119, %p120
      %p122 = scmp.ne.s32.totalorder %s110, %s111
      %p123 = scmp.eq.s32.totalorder %s24, 1
      %p124 = por %p122, %p123
      %p126 = scmp.ne.s32.totalorder %s111, %s125
      %p127 = scmp.eq.s32.totalorder %s24, 0
      %p128 = por %p126, %p127
      %s130 = sadd.s32 %s129, 1
      %p133 = scmp.eq.s32.totalorder %s18, 1
      %p134 = scmp.ne.s32.totalorder %s129, %s131
      %p135 = scmp.eq.s32.totalorder %s18, 0
      %p136 = por %p134, %p135
      %p137 = scmp.ne.s32.totalorder %s129, %s131
      %p138 = scmp.eq.s32.totalorder %s23, 1
      %p139 = por %p137, %p138
      %p140 = scmp.ne.s32.totalorder %s131, %s132
      %p141 = scmp.eq.s32.totalorder %s23, 0
      %p142 = por %p140, %p141
      %p143 = scmp.ne.s32.totalorder %s131, %s132
      %p144 = scmp.eq.s32.totalorder %s24, 1
      %p145 = por %p143, %p144
      %p147 = scmp.ne.s32.totalorder %s132, %s146
      %p148 = scmp.eq.s32.totalorder %s24, 0
      %p149 = por %p147, %p148
      %s150 = ssub.s32 %s25, %s37
      %s151 = ssub.s32 %s26, %s33
      %s152 = sor.u32 %s150, %s151
      %p153 = scmp.eq.s32.totalorder %s152, 0
      %s155 = sadd.s32 %s154, 1
      %s156 = scalar_select %p153, %s154, %s155
      %p159 = pneg %p153
      %p160 = scmp.eq.s32.totalorder %s18, 1
      %p161 = por %p159, %p160
      %p162 = scmp.ne.s32.totalorder %s154, %s157
      %p163 = scmp.eq.s32.totalorder %s18, 0
      %p164 = por %p162, %p163
      %p165 = scmp.ne.s32.totalorder %s154, %s157
      %p166 = scmp.eq.s32.totalorder %s23, 1
      %p167 = por %p165, %p166
      %p168 = scmp.ne.s32.totalorder %s157, %s158
      %p169 = scmp.eq.s32.totalorder %s23, 0
      %p170 = por %p168, %p169
      %p171 = scmp.ne.s32.totalorder %s157, %s158
      %p172 = scmp.eq.s32.totalorder %s24, 1
      %p173 = por %p171, %p172
      %p175 = scmp.ne.s32.totalorder %s158, %s174
      %p176 = scmp.eq.s32.totalorder %s24, 0
      %p177 = por %p175, %p176
      %p178 = scmp.le.s32.totalorder 1, %s18
      %p179 = scmp.lt.s32.totalorder %s18, 3
      %p180 = pnand %p178, %p179
      %p181 = pneg %p180
      // Predicated region
      $region9: #{tpu_custom_call.1} parent=5 // pred_check
        _
      $region10: #{tpu_custom_call.1} parent=5 // pred_check_branch
        %183 = sbr.rel (%p180) target = $region12
      $region11: #{tpu_custom_call.1} parent=5 // pred_region
        %s184 = ssub.s32 %s18, 1
        // Predicated region
        $region13: #{tpu_custom_call.1} parent=11 // pred_check
          %p185 = pneg %p79
        $region14: #{tpu_custom_call.1} parent=11 // pred_check_branch
          %187 = sbr.rel (%p185) target = $region16
        $region15: #{tpu_custom_call.1} parent=11 // pred_region
          _
        $region16: #{tpu_custom_call.1} parent=11 // pred_fallthru
          _
        // Predicated region
        $region17: #{tpu_custom_call.1} parent=11 // pred_check
          %p188 = pneg %p100
        $region18: #{tpu_custom_call.1} parent=11 // pred_check_branch
          %190 = sbr.rel (%p188) target = $region20
        $region19: #{tpu_custom_call.1} parent=11 // pred_region
          _
        $region20: #{tpu_custom_call.1} parent=11 // pred_fallthru
          _
        // Predicated region
        $region21: #{tpu_custom_call.1} parent=11 // pred_check
          %p191 = pneg %p121
        $region22: #{tpu_custom_call.1} parent=11 // pred_check_branch
          %193 = sbr.rel (%p191) target = $region24
        $region23: #{tpu_custom_call.1} parent=11 // pred_region
          %s195 = ssub.s32 256, 256
          %196 = vsyncadd [#allocation6], %s195
          %s197 = sshll.u32 [#allocation5], 4
          %s198 = int_to_ptr.vmem [resolvable:$true] %s197
          %203 = dma.hbm_to_vmem [thread:$0]  %s3, 256, %s198, [#allocation6], 64, 64, 4
        $region24: #{tpu_custom_call.1} parent=11 // pred_fallthru
          _
        // Predicated region
        $region25: #{tpu_custom_call.1} parent=11 // pred_check
          %p204 = pneg %p142
        $region26: #{tpu_custom_call.1} parent=11 // pred_check_branch
          %206 = sbr.rel (%p204) target = $region28
        $region27: #{tpu_custom_call.1} parent=11 // pred_region
          _
        $region28: #{tpu_custom_call.1} parent=11 // pred_fallthru
          _
      $region12: #{tpu_custom_call.1} parent=5 // pred_fallthru
        _
      %p207 = scmp.lt.s32.totalorder %s18, 2
      // Predicated region
      $region29: #{tpu_custom_call.1} parent=5 // pred_check
        %p208 = pneg %p207
      $region30: #{tpu_custom_call.1} parent=5 // pred_check_branch
        %210 = sbr.rel (%p208) target = $region32
      $region31: #{tpu_custom_call.1} parent=5 // pred_region
        // Predicated region
        $region33: #{tpu_custom_call.1} parent=31 // pred_check
          %p211 = pneg %p52
        $region34: #{tpu_custom_call.1} parent=31 // pred_check_branch
          %213 = sbr.rel (%p211) target = $region36
        $region35: #{tpu_custom_call.1} parent=31 // pred_region
          %s214 = sand.u32 %s42, 1
          %s215 = scalar_lea.sflag [#allocation3], %s214
          %s216 = sand.u32 %s42, 1
          %s217 = smul.addr %s216, 8
          %s218 = scalar_lea.vmem [#allocation2], %s217
          %s220 = ssub.s32 128, 128
          %221 = vsyncadd %s215, %s220
          %s222 = sadd.s32 %s26, %s25
          %s223 = smul.addr %s222, 128
          %s224 = scalar_lea.hbm %s0, %s223
          %s226 = sshll.u32 %s218, 4
          %s227 = int_to_ptr.vmem [resolvable:$true] %s226
          %229 = dma.hbm_to_vmem [thread:$0]  %s224, 128, %s227, %s215
        $region36: #{tpu_custom_call.1} parent=31 // pred_fallthru
          _
      $region32: #{tpu_custom_call.1} parent=5 // pred_fallthru
        _
      %p230 = scmp.le.s32.totalorder 1, %s18
      %p231 = scmp.lt.s32.totalorder %s18, 3
      %p232 = pnand %p230, %p231
      %p233 = pneg %p232
      // Predicated region
      $region37: #{tpu_custom_call.1} parent=5 // pred_check
        _
      $region38: #{tpu_custom_call.1} parent=5 // pred_check_branch
        %235 = sbr.rel (%p232) target = $region40
      $region39: #{tpu_custom_call.1} parent=5 // pred_region
        %s236 = ssub.s32 %s18, 1
        %s237 = sand.u32 %s45, 1
        %s238 = scalar_lea.sflag [#allocation3], %s237
        %s239 = sand.u32 %s45, 1
        %s240 = smul.addr %s239, 8
        %s241 = scalar_lea.vmem [#allocation2], %s240
        // Predicated region
        $region41: #{tpu_custom_call.1} parent=39 // pred_check
          %p242 = pneg %p58
        $region42: #{tpu_custom_call.1} parent=39 // pred_check_branch
          %244 = sbr.rel (%p242) target = $region44
        $region43: #{tpu_custom_call.1} parent=39 // pred_region
          %245 = dma.done %s238, 128
        $region44: #{tpu_custom_call.1} parent=39 // pred_fallthru
          _
        // Predicated region
        $region45: #{tpu_custom_call.1} parent=39 // pred_check
          %p246 = pneg %p121
        $region46: #{tpu_custom_call.1} parent=39 // pred_check_branch
          %248 = sbr.rel (%p246) target = $region48
        $region47: #{tpu_custom_call.1} parent=39 // pred_region
          %249 = dma.done [#allocation6], 256
        $region48: #{tpu_custom_call.1} parent=39 // pred_fallthru
          _
        %s250 = sand.u32 %s45, 1
        %s251 = scalar_lea.sflag [#allocation3], %s250
        %s252 = sand.u32 %s45, 1
        %s253 = smul.addr %s252, 8
        %s254 = scalar_lea.vmem [#allocation2], %s253
        %p255 = pneg %p58
        %p256 = pneg %p55
        %p257 = pneg %p79
        %p258 = pneg %p76
        %p259 = pneg %p100
        %p260 = pneg %p97
        %p261 = pneg %p121
        %p262 = pneg %p118
        %p263 = pneg %p142
        %p264 = pneg %p139
        %p265 = pneg %p170
        %p266 = pneg %p167
        %s267 = sand.u32 %s157, 1
        %s268 = scalar_lea.sflag [#allocation4], %s267
        %s269 = sand.u32 %s157, 1
        %s270 = smul.addr %s269, 4
        %s271 = scalar_lea.vmem [#allocation7], %s270
        %v273 = vld [vmem:[%s241] sm:$0xff]
        %v274 = vld [vmem:[%s1] sm:$0x1]
        %v275 = vld [vmem:[%s2] sm:$0x1]
        %vm276 = vcmask 261120
        %v277 = vsel %vm276, %v273, 0.0
        %278 = vadd.xlane.f32.xlu0 %v277
        %v279 = vpop.xlane.xlu0 %278
        %v280 = vrcp.pop 32.0
        %v281 = vmul.f32 %v279, %v280
        %v282 = vsub.f32 %v273, %v281
        %v283 = vmul.f32 %v282, %v282
        %v284 = vsel %vm276, %v283, 0.0
        %285 = vadd.xlane.f32.xlu0 %v284
        %v286 = vpop.xlane.xlu0 %285
        %v287 = vmul.f32 %v286, %v280
        %v288 = vadd.f32 %v287, 1e-05
        %v289 = vrsqrt.pop %v288
        %v290 = vmul.f32 %v282, %v289
        %v292 = vlaneseq
        %v293 = vshrl.u32 %v292, 7
        %v294 = vsub.s32 0, %v293
        %v295 = vrot.slane %v274, %v294
        %v297 = vmul.f32 %v290, %v295
        %v299 = vlaneseq
        %v300 = vshrl.u32 %v299, 7
        %v301 = vsub.s32 0, %v300
        %v302 = vrot.slane %v275, %v301
        %v304 = vadd.f32 %v297, %v302
        %v305 = vpack.c.bf16 %v304, %v304
        %v306 = vld [vmem:[#allocation5] sm:$0xf]
        %v307 = vld [vmem:[#allocation5 + $0x4] sm:$0xf]
        %v308 = vld [vmem:[#allocation5 + $0x8] sm:$0xf]
        %v309 = vld [vmem:[#allocation5 + $0xc] sm:$0xf]
        %v310 = vld [vmem:[%s4] sm:$0x1]
        %v312 = vlaneseq
        %v313 = vshrl.u32 %v312, 7
        %v314 = vsub.s32 0, %v313
        %v315 = vrot.slane %v310, %v314
        %v321 = vunpack.c.l.b16 %v306
        %v322 = vunpack.c.l.b16 %v307
        %v323 = vunpack.c.l.b16 %v308
        %v324 = vunpack.c.l.b16 %v309
        %v325 = vpack.c.b16 %v322, %v321
        %v326 = vpack.c.b16 %v324, %v323
        %v330 = vsel %vm276, %v305, 0
        %332 = vmatprep.subr.bf16.mxu0 0
        %333 = vmatpush1.bf16.msra.mxu0 %v325
        %334 = vmatprep.subr.bf16.mxu0 0
        %335 = vmatpush1.bf16.msra.mxu0 %v326
        %336 = vmatprep.subr.bf16.mxu0 0
        %337 = vmatpush1.bf16.msra.mxu0 0
        %338 = vmatprep.subr.bf16.mxu0 0
        %339 = vmatpush1.bf16.msra.mxu0 0
        %340 = vmatprep.subr.bf16.mxu0 0
        %341 = vmatpush1.bf16.msra.mxu0 0
        %342 = vmatprep.subr.bf16.mxu0 0
        %343 = vmatpush1.bf16.msra.mxu0 0
        %344 = vmatprep.subr.bf16.mxu0 0
        %345 = vmatpush1.bf16.msra.mxu0 0
        %346 = vmatprep.subr.bf16.mxu0 0
        %347 = vmatpush1.bf16.msra.mxu0 0
        %348 = vmatprep.subr.bf16.mxu0 0
        %349 = vmatpush1.bf16.msra.mxu0 0
        %350 = vmatprep.subr.bf16.mxu0 0
        %351 = vmatpush1.bf16.msra.mxu0 0
        %352 = vmatprep.subr.bf16.mxu0 0
        %353 = vmatpush1.bf16.msra.mxu0 0
        %354 = vmatprep.subr.bf16.mxu0 0
        %355 = vmatpush1.bf16.msra.mxu0 0
        %356 = vmatprep.subr.bf16.mxu0 0
        %357 = vmatpush1.bf16.msra.mxu0 0
        %358 = vmatprep.subr.bf16.mxu0 0
        %359 = vmatpush1.bf16.msra.mxu0 0
        %360 = vmatprep.subr.bf16.mxu0 0
        %361 = vmatpush1.bf16.msra.mxu0 0
        %362 = vmatprep.subr.bf16.mxu0 0
        %363 = vmatpush1.bf16.msra.mxu0 0
        %364 = vmatprep.mubr.bf16.mxu0 0
        %365 = vmatmul.mubr.bf16.gmra.mrb[0].mxu0 %v330
        %v366 = vpop.f32.mrb[0].mxu0
        %v367 = vadd.f32 %v315, %v366
        %v368 = vpop.f32.mrb[0].mxu0
        %v369 = vpop.f32.mrb[0].mxu0
        %v370 = vpop.f32.mrb[0].mxu0
        %371 = vdwg.mxu0
        %v372 = vpack.c.bf16 %v367, %v367
        %vm373 = vcmask 781312
        %374 = vst.msk [vmem:[%s271] sm:$0xf] %vm373, %v372
        %s375 = sand.u32 %s157, 1
        %s376 = scalar_lea.sflag [#allocation4], %s375
        %s377 = sand.u32 %s157, 1
        %s378 = smul.addr %s377, 4
        %s379 = scalar_lea.vmem [#allocation7], %s378
        // Predicated region
        $region49: #{tpu_custom_call.1} parent=39 // pred_check
          %p380 = pneg %p167
        $region50: #{tpu_custom_call.1} parent=39 // pred_check_branch
          %382 = sbr.rel (%p380) target = $region52
        $region51: #{tpu_custom_call.1} parent=39 // pred_region
          %s384 = ssub.s32 64, 64
          %385 = vsyncadd %s376, %s384
          %s386 = sadd.s32 %s28, %s27
          %s387 = smul.addr %s386, 64
          %s388 = scalar_lea.hbm %s5, %s387
          %s390 = sshll.u32 %s379, 4
          %s391 = int_to_ptr.vmem [resolvable:$true] %s390
          %393 = dma.vmem_to_hbm [thread:$0]  %s391, 64, %s388, %s376
        $region52: #{tpu_custom_call.1} parent=39 // pred_fallthru
          _
      $region40: #{tpu_custom_call.1} parent=5 // pred_fallthru
        _
      %p394 = scmp.le.s32.totalorder 2, %s18
      // Predicated region
      $region53: #{tpu_custom_call.1} parent=5 // pred_check
        %p395 = pneg %p394
      $region54: #{tpu_custom_call.1} parent=5 // pred_check_branch
        %397 = sbr.rel (%p395) target = $region56
      $region55: #{tpu_custom_call.1} parent=5 // pred_region
        %s398 = ssub.s32 %s18, 2
        // Predicated region
        $region57: #{tpu_custom_call.1} parent=55 // pred_check
          %p399 = pneg %p173
        $region58: #{tpu_custom_call.1} parent=55 // pred_check_branch
          %401 = sbr.rel (%p399) target = $region60
        $region59: #{tpu_custom_call.1} parent=55 // pred_region
          %s402 = sand.u32 %s158, 1
          %s403 = scalar_lea.sflag [#allocation4], %s402
          %s404 = sand.u32 %s158, 1
          %s405 = smul.addr %s404, 4
          %s406 = scalar_lea.vmem [#allocation7], %s405
          %407 = dma.done %s403, 64
        $region60: #{tpu_custom_call.1} parent=55 // pred_fallthru
          _
      $region56: #{tpu_custom_call.1} parent=5 // pred_fallthru
        _
    $region6: #{tpu_custom_call.1} parent=1 // loop_footer
      %s22 = sadd.s32 1, %s18
    $region7: #{tpu_custom_call.1} parent=1 // loop_footer_branch
      %17 = sbr.rel target = $region3
    $region8: #{tpu_custom_call.1} parent=1 // loop_exit
      _
    %408 = vsyncpa [#allocation3], 1
    %s409 = scalar_lea.sflag [#allocation3], 1
    %410 = vsyncpa %s409, 1
    %411 = vsyncpa [#allocation6], 1
    %412 = vsyncpa [#allocation4], 1
    %s413 = scalar_lea.sflag [#allocation4], 1
    %414 = vsyncpa %s413, 1

</llo_original>
